<compile_context>
chip_gen: v6e
topology: v6e:2x2x1
jax: 0.10.0
libtpu: 0.0.40
codegen_flags: <defaults>
</compile_context>

<pallas_src>
import functools

import jax
import jax.numpy as jnp
from jax import lax
from jax.experimental import pallas as pl
from jax.experimental.pallas import tpu as pltpu

EPS = 1e-5


def bottleneck_kernel(x_ref, w1_ref, g1_ref, b1_ref,
                      w2_ref, g2_ref, b2_ref,
                      w3_ref, g3_ref, b3_ref,
                      psum_m_ref, pexp_m_ref, psum_o_ref, pexp_o_ref,
                      out_ref, st_ref, *, H, W):
    R = x_ref.shape[0]                 # N*H rows
    WCm = w1_ref.shape[1]              # W * Cmid
    inv_nhw = 1.0 / float(R * W)       # 1 / (N*H*W)

    def bn(o, psum_ref, pexp_ref, g_ref, b_ref, relu):
        # Training-mode BatchNorm in the flattened (R, W*C) layout, f32 stats.
        # Stack sum / sum-of-squares into one operand -> one reduce matmul
        # against the small (W*C, C) group-sum projector, then expand back.
        s = jnp.sum(o, axis=0, keepdims=True)                  # (1, W*C)
        ss = jnp.sum(o * o, axis=0, keepdims=True)             # (1, W*C)
        stats = jnp.concatenate([s, ss], axis=0)               # (2, W*C)
        stats_c = jnp.dot(stats, psum_ref[...],
                          preferred_element_type=jnp.float32) * inv_nhw   # (2, C)
        stats_wc = jnp.dot(stats_c, pexp_ref[...],
                           preferred_element_type=jnp.float32)             # (2, W*C)
        mean = stats_wc[0:1, :]
        var = stats_wc[1:2, :] - mean * mean                   # biased variance
        scale = g_ref[...] * lax.rsqrt(var + EPS)
        shift = b_ref[...] - mean * scale
        y = o * scale + shift
        return jnp.maximum(y, 0.0) if relu else y

    # ---- conv1 (1x1): block-diagonal lane-dense matmul, bf16 ops / f32 acc ----
    o1 = jnp.dot(x_ref[...].astype(jnp.bfloat16), w1_ref[...],
                 preferred_element_type=jnp.float32)           # (R, W*Cmid)
    h1 = bn(o1, psum_m_ref, pexp_m_ref, g1_ref, b1_ref, True)  # f32

    # ---- conv2 (3x3, pad=1): one fused GEMM over K-concatenated dy taps -------
    # dx taps and W-direction zero padding are folded into the banded weights;
    # dy shifts are XLU rolls masked at per-image row boundaries.
    row = lax.broadcasted_iota(jnp.int32, (R, 1), 0) % H       # narrow (R,1)
    up_ok = (row < H - 1).astype(jnp.float32)                  # row r may read r+1
    dn_ok = (row > 0).astype(jnp.float32)                      # row r may read r-1
    up = pltpu.roll(h1, shift=R - 1, axis=0) * up_ok           # row r <- row r+1
    dn = pltpu.roll(h1, shift=1, axis=0) * dn_ok               # row r <- row r-1
    st_ref[:, 0:WCm] = dn.astype(jnp.bfloat16)                 # dy = -1 taps
    st_ref[:, WCm:2 * WCm] = h1.astype(jnp.bfloat16)           # dy =  0 taps
    st_ref[:, 2 * WCm:3 * WCm] = up.astype(jnp.bfloat16)       # dy = +1 taps
    o2 = jnp.dot(st_ref[...], w2_ref[...],
                 preferred_element_type=jnp.float32)           # (R, W*Cmid)
    h2 = bn(o2, psum_m_ref, pexp_m_ref, g2_ref, b2_ref, True)

    # ---- conv3 (1x1) + bn3 (no relu) ------------------------------------------
    o3 = jnp.dot(h2.astype(jnp.bfloat16), w3_ref[...],
                 preferred_element_type=jnp.float32)           # (R, W*C4)
    o3 = bn(o3, psum_o_ref, pexp_o_ref, g3_ref, b3_ref, False)

    # ---- residual (identity lazily re-read, already lane-dense) + relu --------
    out_ref[...] = jnp.maximum(o3 + x_ref[...], 0.0).astype(out_ref.dtype)


def prepare_params(w1_pt, w2_pt, w3_pt, g1, b1, g2, b2, g3, b3, *, W):
    """One-time conversion of PyTorch OIHW weights into kernel layout."""
    Cmid = w1_pt.shape[0]
    C4 = w3_pt.shape[0]
    w1 = jnp.transpose(w1_pt[:, :, 0, 0], (1, 0))             # (Cin, Cmid)
    w2 = jnp.transpose(w2_pt, (2, 3, 1, 0))                   # (kH, kW, Cin, Cout)
    w3 = jnp.transpose(w3_pt[:, :, 0, 0], (1, 0))             # (Cmid, C4)

    eye = jnp.eye(W, dtype=jnp.float32)
    w1_bd = jnp.kron(eye, w1).astype(jnp.bfloat16)            # (W*Cin, W*Cmid)
    w3_bd = jnp.kron(eye, w3).astype(jnp.bfloat16)            # (W*Cmid, W*C4)

    # 3x3 conv: for each dy, fold the 3 dx taps + W-direction zero padding into
    # a banded (W*Cmid, W*Cmid) block; K-concatenate the three dy bands so the
    # kernel does a single GEMM against the [dn | mid | up] staging buffer.
    bands = []
    for dy in range(3):
        m = jnp.zeros((W * Cmid, W * Cmid), jnp.float32)
        for dx_i in range(3):
            m = m + jnp.kron(jnp.eye(W, k=-(dx_i - 1), dtype=jnp.float32),
                             w2[dy, dx_i])
        bands.append(m)
    w2_cat = jnp.concatenate(bands, axis=0).astype(jnp.bfloat16)  # (3*W*Cmid, W*Cmid)

    def psum(C):      # (W*C, C) 0/1 group-sum projector: column j -> channel j % C
        idx = jnp.arange(W * C)
        return (idx[:, None] % C == jnp.arange(C)[None, :]).astype(jnp.float32)

    def pexp(C):      # (C, W*C) 0/1 expand-back: channel c -> columns with j % C == c
        idx = jnp.arange(W * C)
        return (jnp.arange(C)[:, None] == idx[None, :] % C).astype(jnp.float32)

    def tile_c(v):    # per-channel (C,) -> per-column (1, W*C)
        return jnp.tile(jnp.asarray(v, jnp.float32).reshape(1, -1), (1, W))

    return dict(w1=w1_bd, g1=tile_c(g1), b1=tile_c(b1),
                w2=w2_cat, g2=tile_c(g2), b2=tile_c(b2),
                w3=w3_bd, g3=tile_c(g3), b3=tile_c(b3),
                psum_mid=psum(Cmid), pexp_mid=pexp(Cmid),
                psum_out=psum(C4), pexp_out=pexp(C4))


def bottleneck_forward(x_nhwc, params, *, H, W):
    """x_nhwc: (N, H, W, Cin) f32. Returns (N, H, W, 4*Cmid) f32."""
    N, _, _, Cin = x_nhwc.shape
    WCm = params["w1"].shape[1]
    WC4 = params["w3"].shape[1]
    C4 = WC4 // W
    assert Cin == C4, "downsample=None requires in_channels == 4*out_channels"
    R = N * H

    x2d = x_nhwc.reshape(R, W * Cin)      # contiguous -> free; lane-dense slab
    args = (x2d, params["w1"], params["g1"], params["b1"],
            params["w2"], params["g2"], params["b2"],
            params["w3"], params["g3"], params["b3"],
            params["psum_mid"], params["pexp_mid"],
            params["psum_out"], params["pexp_out"])

    flops = 2 * R * (W * Cin * WCm + 3 * WCm * WCm + WCm * WC4)
    bytes_accessed = sum(int(a.size) * a.dtype.itemsize for a in args) + R * WC4 * 4
    # Live-set estimate (~6 full-size f32 slabs) + I/O, with 2x margin; clamp.
    live_f32 = 6 * R * max(W * Cin, WCm, WC4) * 4
    vmem_limit = int(min(32 * 1024 * 1024,
                         max(8 * 1024 * 1024, 2 * (bytes_accessed + live_f32))))

    vmem = pl.BlockSpec(memory_space=pltpu.MemorySpace.VMEM)
    kernel = functools.partial(bottleneck_kernel, H=H, W=W)
    out2d = pl.pallas_call(
        kernel,
        out_shape=jax.ShapeDtypeStruct((R, WC4), x_nhwc.dtype),
        in_specs=[vmem] * len(args),
        out_specs=vmem,
        scratch_shapes=[pltpu.VMEM((R, 3 * WCm), jnp.bfloat16)],  # conv2 K-concat staging
        compiler_params=pltpu.CompilerParams(vmem_limit_bytes=vmem_limit),
        cost_estimate=pl.CostEstimate(flops=flops,
                                      transcendentals=2 * WCm + WC4,
                                      bytes_accessed=bytes_accessed),
    )(*args)
    return out2d.reshape(N, H, W, C4)


def ref_forward(x_nchw, pt_weights):
    """Pure-JAX reference mimicking the PyTorch module (training-mode BN)."""
    w1, w2, w3 = pt_weights  # OIHW

    def bn(o):  # gamma=1, beta=0 (PyTorch default init)
        mean = jnp.mean(o, axis=(0, 2, 3), keepdims=True)
        var = jnp.var(o, axis=(0, 2, 3), keepdims=True)
        return (o - mean) / jnp.sqrt(var + EPS)

    dn = ('NCHW', 'OIHW', 'NCHW')
    o = lax.conv_general_dilated(x_nchw, w1, (1, 1), 'VALID', dimension_numbers=dn)
    o = jax.nn.relu(bn(o))
    o = lax.conv_general_dilated(o, w2, (1, 1), ((1, 1), (1, 1)), dimension_numbers=dn)
    o = jax.nn.relu(bn(o))
    o = lax.conv_general_dilated(o, w3, (1, 1), 'VALID', dimension_numbers=dn)
    o = bn(o)
    return jax.nn.relu(o + x_nchw)


if __name__ == "__main__":
    N, H, Wd, Cin = 2, 8, 8, 16     # in_channels = 16 = 4 * out_channels
    Cmid = 4                        # out_channels
    C4 = 4 * Cmid

    key = jax.random.PRNGKey(0)
    k0, k1, k2, k3 = jax.random.split(key, 4)
    # Model kept NHWC end-to-end on the kernel path (no per-call transposes).
    x_nhwc = jax.random.normal(k0, (N, H, Wd, Cin), jnp.float32)

    # Deterministic conv weights in PyTorch OIHW layout.
    w1_pt = jax.random.normal(k1, (Cmid, Cin, 1, 1), jnp.float32) * 0.1
    w2_pt = jax.random.normal(k2, (Cmid, Cmid, 3, 3), jnp.float32) * 0.1
    w3_pt = jax.random.normal(k3, (C4, Cmid, 1, 1), jnp.float32) * 0.1

    # BatchNorm affine params: PyTorch default init (gamma=1, beta=0).
    g1 = jnp.ones((Cmid,)); b1 = jnp.zeros((Cmid,))
    g2 = jnp.ones((Cmid,)); b2 = jnp.zeros((Cmid,))
    g3 = jnp.ones((C4,));   b3 = jnp.zeros((C4,))

    params = prepare_params(w1_pt, w2_pt, w3_pt, g1, b1, g2, b2, g3, b3, W=Wd)
    out = bottleneck_forward(x_nhwc, params, H=H, W=Wd)
    out = jax.block_until_ready(out)

    # Reference computed in NCHW; layout conversion happens once, outside the
    # kernel path, for verification only.
    x_nchw = jnp.transpose(x_nhwc, (0, 3, 1, 2))
    ref = jnp.transpose(ref_forward(x_nchw, (w1_pt, w2_pt, w3_pt)), (0, 2, 3, 1))

    assert out.shape == (N, H, Wd, C4)
    err = float(jnp.max(jnp.abs(out - ref)))
    # Tolerance accounts for bf16 MXU operands (f32 accumulation, f32 BN stats).
    assert jnp.allclose(out, ref, rtol=2e-2, atol=2e-2), f"max abs err {err}"
    print("KERNEL_OK")
</pallas_src>

<mosaic_0001>
module attributes {stable_mosaic.version = 11 : i64} {
  func.func @bottleneck_kernel(%arg0: memref<16x128xf32, #tpu.memory_space<vmem>>, %arg1: memref<128x32xbf16, #tpu.memory_space<vmem>>, %arg2: memref<1x32xf32, #tpu.memory_space<vmem>>, %arg3: memref<1x32xf32, #tpu.memory_space<vmem>>, %arg4: memref<96x32xbf16, #tpu.memory_space<vmem>>, %arg5: memref<1x32xf32, #tpu.memory_space<vmem>>, %arg6: memref<1x32xf32, #tpu.memory_space<vmem>>, %arg7: memref<32x128xbf16, #tpu.memory_space<vmem>>, %arg8: memref<1x128xf32, #tpu.memory_space<vmem>>, %arg9: memref<1x128xf32, #tpu.memory_space<vmem>>, %arg10: memref<32x4xf32, #tpu.memory_space<vmem>>, %arg11: memref<4x32xf32, #tpu.memory_space<vmem>>, %arg12: memref<128x16xf32, #tpu.memory_space<vmem>>, %arg13: memref<16x128xf32, #tpu.memory_space<vmem>>, %arg14: memref<16x128xf32, #tpu.memory_space<vmem>>, %arg15: memref<16x96xbf16, #tpu.memory_space<vmem>>) attributes {dimension_semantics = [], scalar_prefetch = 0 : i64, scratch_operands = 1 : i64, tpu.core_type = #tpu.core_type<tc>} {
    %c0 = arith.constant 0 : index
    %c0_0 = arith.constant 0 : index
    %0 = vector.load %arg0[%c0, %c0_0] : memref<16x128xf32, #tpu.memory_space<vmem>>, vector<16x128xf32>
    %1 = arith.truncf %0 : vector<16x128xf32> to vector<16x128xbf16>
    %c0_1 = arith.constant 0 : index
    %c0_2 = arith.constant 0 : index
    %2 = vector.load %arg1[%c0_1, %c0_2] : memref<128x32xbf16, #tpu.memory_space<vmem>>, vector<128x32xbf16>
    %cst = arith.constant dense<0.000000e+00> : vector<16x32xf32>
    %3 = tpu.matmul %1, %2, %cst {dimension_numbers = #tpu.dot_dimension_numbers<[1], [0], [0], [1], [0, 0, 1, 1], [], []>} : vector<16x128xbf16>, vector<128x32xbf16>, vector<16x32xf32> -> vector<16x32xf32>
    %cst_3 = arith.constant dense<0.000000e+00> : vector<32xf32>
    %4 = vector.multi_reduction <add>, %3, %cst_3 [0] : vector<16x32xf32> to vector<32xf32>
    %5 = vector.shape_cast %4 : vector<32xf32> to vector<1x32xf32>
    %6 = arith.mulf %3, %3 : vector<16x32xf32>
    %cst_4 = arith.constant dense<0.000000e+00> : vector<32xf32>
    %7 = vector.multi_reduction <add>, %6, %cst_4 [0] : vector<16x32xf32> to vector<32xf32>
    %8 = vector.shape_cast %7 : vector<32xf32> to vector<1x32xf32>
    %9 = tpu.concatenate %5, %8 in 0 : vector<1x32xf32>, vector<1x32xf32> -> vector<2x32xf32>
    %c0_5 = arith.constant 0 : index
    %c0_6 = arith.constant 0 : index
    %10 = vector.load %arg10[%c0_5, %c0_6] : memref<32x4xf32, #tpu.memory_space<vmem>>, vector<32x4xf32>
    %cst_7 = arith.constant dense<0.000000e+00> : vector<2x4xf32>
    %11 = tpu.matmul %9, %10, %cst_7 {dimension_numbers = #tpu.dot_dimension_numbers<[1], [0], [0], [1], [0, 0, 1, 1], [], []>} : vector<2x32xf32>, vector<32x4xf32>, vector<2x4xf32> -> vector<2x4xf32>
    %cst_8 = arith.constant 7.812500e-03 : f32
    %12 = vector.broadcast %cst_8 : f32 to vector<2x4xf32>
    %13 = arith.mulf %11, %12 : vector<2x4xf32>
    %c0_9 = arith.constant 0 : index
    %c0_10 = arith.constant 0 : index
    %14 = vector.load %arg11[%c0_9, %c0_10] : memref<4x32xf32, #tpu.memory_space<vmem>>, vector<4x32xf32>
    %cst_11 = arith.constant dense<0.000000e+00> : vector<2x32xf32>
    %15 = tpu.matmul %13, %14, %cst_11 {dimension_numbers = #tpu.dot_dimension_numbers<[1], [0], [0], [1], [0, 0, 1, 1], [], []>} : vector<2x4xf32>, vector<4x32xf32>, vector<2x32xf32> -> vector<2x32xf32>
    %16 = vector.extract_strided_slice %15 {offsets = [0, 0], sizes = [1, 32], strides = [1, 1]} : vector<2x32xf32> to vector<1x32xf32>
    %17 = vector.extract_strided_slice %15 {offsets = [1, 0], sizes = [1, 32], strides = [1, 1]} : vector<2x32xf32> to vector<1x32xf32>
    %18 = arith.mulf %16, %16 : vector<1x32xf32>
    %19 = arith.subf %17, %18 : vector<1x32xf32>
    %c0_12 = arith.constant 0 : index
    %c0_13 = arith.constant 0 : index
    %20 = vector.load %arg2[%c0_12, %c0_13] : memref<1x32xf32, #tpu.memory_space<vmem>>, vector<1x32xf32>
    %cst_14 = arith.constant 9.99999974E-6 : f32
    %21 = vector.broadcast %cst_14 : f32 to vector<1x32xf32>
    %22 = arith.addf %19, %21 : vector<1x32xf32>
    %23 = math.rsqrt %22 : vector<1x32xf32>
    %24 = arith.mulf %20, %23 : vector<1x32xf32>
    %c0_15 = arith.constant 0 : index
    %c0_16 = arith.constant 0 : index
    %25 = vector.load %arg3[%c0_15, %c0_16] : memref<1x32xf32, #tpu.memory_space<vmem>>, vector<1x32xf32>
    %26 = arith.mulf %16, %24 : vector<1x32xf32>
    %27 = arith.subf %25, %26 : vector<1x32xf32>
    %28 = vector.broadcast %24 : vector<1x32xf32> to vector<16x32xf32>
    %29 = arith.mulf %3, %28 : vector<16x32xf32>
    %30 = vector.broadcast %27 : vector<1x32xf32> to vector<16x32xf32>
    %31 = arith.addf %29, %30 : vector<16x32xf32>
    %cst_17 = arith.constant 0.000000e+00 : f32
    %32 = vector.broadcast %cst_17 : f32 to vector<16x32xf32>
    %33 = arith.maximumf %31, %32 : vector<16x32xf32>
    %34 = tpu.iota {dimensions = array<i32: 0>} : vector<16x1xi32>
    %c8_i32 = arith.constant 8 : i32
    %c0_i32 = arith.constant 0 : i32
    %35 = arith.cmpi eq, %c8_i32, %c0_i32 : i32
    %c1_i32 = arith.constant 1 : i32
    %36 = arith.select %35, %c1_i32, %c8_i32 : i32
    %37 = vector.broadcast %36 : i32 to vector<16x1xi32>
    %38 = arith.remsi %34, %37 : vector<16x1xi32>
    %c0_i32_18 = arith.constant 0 : i32
    %39 = vector.broadcast %c0_i32_18 : i32 to vector<16x1xi32>
    %40 = arith.cmpi ne, %38, %39 : vector<16x1xi32>
    %c0_i32_19 = arith.constant 0 : i32
    %41 = vector.broadcast %c0_i32_19 : i32 to vector<16x1xi32>
    %42 = arith.cmpi slt, %38, %41 : vector<16x1xi32>
    %c0_i32_20 = arith.constant 0 : i32
    %43 = arith.cmpi slt, %36, %c0_i32_20 : i32
    %44 = vector.broadcast %43 : i1 to vector<16x1xi1>
    %45 = vector.broadcast %44 : vector<16x1xi1> to vector<16x1xi1>
    %46 = arith.xori %42, %45 : vector<16x1xi1>
    %47 = arith.andi %46, %40 : vector<16x1xi1>
    %48 = vector.broadcast %36 : i32 to vector<16x1xi32>
    %49 = arith.addi %38, %48 : vector<16x1xi32>
    %50 = arith.select %47, %49, %38 : vector<16x1xi1>, vector<16x1xi32>
    %c7_i32 = arith.constant 7 : i32
    %51 = vector.broadcast %c7_i32 : i32 to vector<16x1xi32>
    %52 = arith.cmpi slt, %50, %51 : vector<16x1xi32>
    %53 = arith.extui %52 : vector<16x1xi1> to vector<16x1xi32>
    %54 = arith.sitofp %53 : vector<16x1xi32> to vector<16x1xf32>
    %c0_i32_21 = arith.constant 0 : i32
    %55 = vector.broadcast %c0_i32_21 : i32 to vector<16x1xi32>
    %56 = arith.cmpi sgt, %50, %55 : vector<16x1xi32>
    %57 = arith.extui %56 : vector<16x1xi1> to vector<16x1xi32>
    %58 = arith.sitofp %57 : vector<16x1xi32> to vector<16x1xf32>
    %c15_i32 = arith.constant 15 : i32
    %59 = tpu.dynamic_rotate %33 by %c15_i32 dim 0 : vector<16x32xf32>, i32 -> vector<16x32xf32>
    %60 = vector.broadcast %54 : vector<16x1xf32> to vector<16x32xf32>
    %61 = arith.mulf %59, %60 : vector<16x32xf32>
    %c1_i32_22 = arith.constant 1 : i32
    %62 = tpu.dynamic_rotate %33 by %c1_i32_22 dim 0 : vector<16x32xf32>, i32 -> vector<16x32xf32>
    %63 = vector.broadcast %58 : vector<16x1xf32> to vector<16x32xf32>
    %64 = arith.mulf %62, %63 : vector<16x32xf32>
    %65 = arith.truncf %64 : vector<16x32xf32> to vector<16x32xbf16>
    %c0_23 = arith.constant 0 : index
    %c0_24 = arith.constant 0 : index
    %66 = vector.load %arg15[%c0_23, %c0_24] : memref<16x96xbf16, #tpu.memory_space<vmem>>, vector<16x32xbf16>
    tpu.vector_store %arg15[%c0_23, %c0_24], %65 {strides = array<i32>} : memref<16x96xbf16, #tpu.memory_space<vmem>>, vector<16x32xbf16>,
    %67 = arith.truncf %33 : vector<16x32xf32> to vector<16x32xbf16>
    %c0_25 = arith.constant 0 : index
    %c32 = arith.constant 32 : index
    %68 = vector.load %arg15[%c0_25, %c32] : memref<16x96xbf16, #tpu.memory_space<vmem>>, vector<16x32xbf16>
    tpu.vector_store %arg15[%c0_25, %c32], %67 {strides = array<i32>} : memref<16x96xbf16, #tpu.memory_space<vmem>>, vector<16x32xbf16>,
    %69 = arith.truncf %61 : vector<16x32xf32> to vector<16x32xbf16>
    %c0_26 = arith.constant 0 : index
    %c64 = arith.constant 64 : index
    %70 = vector.load %arg15[%c0_26, %c64] : memref<16x96xbf16, #tpu.memory_space<vmem>>, vector<16x32xbf16>
    tpu.vector_store %arg15[%c0_26, %c64], %69 {strides = array<i32>} : memref<16x96xbf16, #tpu.memory_space<vmem>>, vector<16x32xbf16>,
    %c0_27 = arith.constant 0 : index
    %c0_28 = arith.constant 0 : index
    %71 = vector.load %arg15[%c0_27, %c0_28] : memref<16x96xbf16, #tpu.memory_space<vmem>>, vector<16x96xbf16>
    %c0_29 = arith.constant 0 : index
    %c0_30 = arith.constant 0 : index
    %72 = vector.load %arg4[%c0_29, %c0_30] : memref<96x32xbf16, #tpu.memory_space<vmem>>, vector<96x32xbf16>
    %cst_31 = arith.constant dense<0.000000e+00> : vector<16x32xf32>
    %73 = tpu.matmul %71, %72, %cst_31 {dimension_numbers = #tpu.dot_dimension_numbers<[1], [0], [0], [1], [0, 0, 1, 1], [], []>} : vector<16x96xbf16>, vector<96x32xbf16>, vector<16x32xf32> -> vector<16x32xf32>
    %cst_32 = arith.constant dense<0.000000e+00> : vector<32xf32>
    %74 = vector.multi_reduction <add>, %73, %cst_32 [0] : vector<16x32xf32> to vector<32xf32>
    %75 = vector.shape_cast %74 : vector<32xf32> to vector<1x32xf32>
    %76 = arith.mulf %73, %73 : vector<16x32xf32>
    %cst_33 = arith.constant dense<0.000000e+00> : vector<32xf32>
    %77 = vector.multi_reduction <add>, %76, %cst_33 [0] : vector<16x32xf32> to vector<32xf32>
    %78 = vector.shape_cast %77 : vector<32xf32> to vector<1x32xf32>
    %79 = tpu.concatenate %75, %78 in 0 : vector<1x32xf32>, vector<1x32xf32> -> vector<2x32xf32>
    %c0_34 = arith.constant 0 : index
    %c0_35 = arith.constant 0 : index
    %80 = vector.load %arg10[%c0_34, %c0_35] : memref<32x4xf32, #tpu.memory_space<vmem>>, vector<32x4xf32>
    %cst_36 = arith.constant dense<0.000000e+00> : vector<2x4xf32>
    %81 = tpu.matmul %79, %80, %cst_36 {dimension_numbers = #tpu.dot_dimension_numbers<[1], [0], [0], [1], [0, 0, 1, 1], [], []>} : vector<2x32xf32>, vector<32x4xf32>, vector<2x4xf32> -> vector<2x4xf32>
    %cst_37 = arith.constant 7.812500e-03 : f32
    %82 = vector.broadcast %cst_37 : f32 to vector<2x4xf32>
    %83 = arith.mulf %81, %82 : vector<2x4xf32>
    %c0_38 = arith.constant 0 : index
    %c0_39 = arith.constant 0 : index
    %84 = vector.load %arg11[%c0_38, %c0_39] : memref<4x32xf32, #tpu.memory_space<vmem>>, vector<4x32xf32>
    %cst_40 = arith.constant dense<0.000000e+00> : vector<2x32xf32>
    %85 = tpu.matmul %83, %84, %cst_40 {dimension_numbers = #tpu.dot_dimension_numbers<[1], [0], [0], [1], [0, 0, 1, 1], [], []>} : vector<2x4xf32>, vector<4x32xf32>, vector<2x32xf32> -> vector<2x32xf32>
    %86 = vector.extract_strided_slice %85 {offsets = [0, 0], sizes = [1, 32], strides = [1, 1]} : vector<2x32xf32> to vector<1x32xf32>
    %87 = vector.extract_strided_slice %85 {offsets = [1, 0], sizes = [1, 32], strides = [1, 1]} : vector<2x32xf32> to vector<1x32xf32>
    %88 = arith.mulf %86, %86 : vector<1x32xf32>
    %89 = arith.subf %87, %88 : vector<1x32xf32>
    %c0_41 = arith.constant 0 : index
    %c0_42 = arith.constant 0 : index
    %90 = vector.load %arg5[%c0_41, %c0_42] : memref<1x32xf32, #tpu.memory_space<vmem>>, vector<1x32xf32>
    %cst_43 = arith.constant 9.99999974E-6 : f32
    %91 = vector.broadcast %cst_43 : f32 to vector<1x32xf32>
    %92 = arith.addf %89, %91 : vector<1x32xf32>
    %93 = math.rsqrt %92 : vector<1x32xf32>
    %94 = arith.mulf %90, %93 : vector<1x32xf32>
    %c0_44 = arith.constant 0 : index
    %c0_45 = arith.constant 0 : index
    %95 = vector.load %arg6[%c0_44, %c0_45] : memref<1x32xf32, #tpu.memory_space<vmem>>, vector<1x32xf32>
    %96 = arith.mulf %86, %94 : vector<1x32xf32>
    %97 = arith.subf %95, %96 : vector<1x32xf32>
    %98 = vector.broadcast %94 : vector<1x32xf32> to vector<16x32xf32>
    %99 = arith.mulf %73, %98 : vector<16x32xf32>
    %100 = vector.broadcast %97 : vector<1x32xf32> to vector<16x32xf32>
    %101 = arith.addf %99, %100 : vector<16x32xf32>
    %cst_46 = arith.constant 0.000000e+00 : f32
    %102 = vector.broadcast %cst_46 : f32 to vector<16x32xf32>
    %103 = arith.maximumf %101, %102 : vector<16x32xf32>
    %104 = arith.truncf %103 : vector<16x32xf32> to vector<16x32xbf16>
    %c0_47 = arith.constant 0 : index
    %c0_48 = arith.constant 0 : index
    %105 = vector.load %arg7[%c0_47, %c0_48] : memref<32x128xbf16, #tpu.memory_space<vmem>>, vector<32x128xbf16>
    %cst_49 = arith.constant dense<0.000000e+00> : vector<16x128xf32>
    %106 = tpu.matmul %104, %105, %cst_49 {dimension_numbers = #tpu.dot_dimension_numbers<[1], [0], [0], [1], [0, 0, 1, 1], [], []>} : vector<16x32xbf16>, vector<32x128xbf16>, vector<16x128xf32> -> vector<16x128xf32>
    %cst_50 = arith.constant dense<0.000000e+00> : vector<128xf32>
    %107 = vector.multi_reduction <add>, %106, %cst_50 [0] : vector<16x128xf32> to vector<128xf32>
    %108 = vector.shape_cast %107 : vector<128xf32> to vector<1x128xf32>
    %109 = arith.mulf %106, %106 : vector<16x128xf32>
    %cst_51 = arith.constant dense<0.000000e+00> : vector<128xf32>
    %110 = vector.multi_reduction <add>, %109, %cst_51 [0] : vector<16x128xf32> to vector<128xf32>
    %111 = vector.shape_cast %110 : vector<128xf32> to vector<1x128xf32>
    %112 = tpu.concatenate %108, %111 in 0 : vector<1x128xf32>, vector<1x128xf32> -> vector<2x128xf32>
    %c0_52 = arith.constant 0 : index
    %c0_53 = arith.constant 0 : index
    %113 = vector.load %arg12[%c0_52, %c0_53] : memref<128x16xf32, #tpu.memory_space<vmem>>, vector<128x16xf32>
    %cst_54 = arith.constant dense<0.000000e+00> : vector<2x16xf32>
    %114 = tpu.matmul %112, %113, %cst_54 {dimension_numbers = #tpu.dot_dimension_numbers<[1], [0], [0], [1], [0, 0, 1, 1], [], []>} : vector<2x128xf32>, vector<128x16xf32>, vector<2x16xf32> -> vector<2x16xf32>
    %cst_55 = arith.constant 7.812500e-03 : f32
    %115 = vector.broadcast %cst_55 : f32 to vector<2x16xf32>
    %116 = arith.mulf %114, %115 : vector<2x16xf32>
    %c0_56 = arith.constant 0 : index
    %c0_57 = arith.constant 0 : index
    %117 = vector.load %arg13[%c0_56, %c0_57] : memref<16x128xf32, #tpu.memory_space<vmem>>, vector<16x128xf32>
    %cst_58 = arith.constant dense<0.000000e+00> : vector<2x128xf32>
    %118 = tpu.matmul %116, %117, %cst_58 {dimension_numbers = #tpu.dot_dimension_numbers<[1], [0], [0], [1], [0, 0, 1, 1], [], []>} : vector<2x16xf32>, vector<16x128xf32>, vector<2x128xf32> -> vector<2x128xf32>
    %119 = vector.extract_strided_slice %118 {offsets = [0, 0], sizes = [1, 128], strides = [1, 1]} : vector<2x128xf32> to vector<1x128xf32>
    %120 = vector.extract_strided_slice %118 {offsets = [1, 0], sizes = [1, 128], strides = [1, 1]} : vector<2x128xf32> to vector<1x128xf32>
    %121 = arith.mulf %119, %119 : vector<1x128xf32>
    %122 = arith.subf %120, %121 : vector<1x128xf32>
    %c0_59 = arith.constant 0 : index
    %c0_60 = arith.constant 0 : index
    %123 = vector.load %arg8[%c0_59, %c0_60] : memref<1x128xf32, #tpu.memory_space<vmem>>, vector<1x128xf32>
    %cst_61 = arith.constant 9.99999974E-6 : f32
    %124 = vector.broadcast %cst_61 : f32 to vector<1x128xf32>
    %125 = arith.addf %122, %124 : vector<1x128xf32>
    %126 = math.rsqrt %125 : vector<1x128xf32>
    %127 = arith.mulf %123, %126 : vector<1x128xf32>
    %c0_62 = arith.constant 0 : index
    %c0_63 = arith.constant 0 : index
    %128 = vector.load %arg9[%c0_62, %c0_63] : memref<1x128xf32, #tpu.memory_space<vmem>>, vector<1x128xf32>
    %129 = arith.mulf %119, %127 : vector<1x128xf32>
    %130 = arith.subf %128, %129 : vector<1x128xf32>
    %131 = vector.broadcast %127 : vector<1x128xf32> to vector<16x128xf32>
    %132 = arith.mulf %106, %131 : vector<16x128xf32>
    %133 = vector.broadcast %130 : vector<1x128xf32> to vector<16x128xf32>
    %134 = arith.addf %132, %133 : vector<16x128xf32>
    %c0_64 = arith.constant 0 : index
    %c0_65 = arith.constant 0 : index
    %135 = vector.load %arg0[%c0_64, %c0_65] : memref<16x128xf32, #tpu.memory_space<vmem>>, vector<16x128xf32>
    %136 = arith.addf %134, %135 : vector<16x128xf32>
    %cst_66 = arith.constant 0.000000e+00 : f32
    %137 = vector.broadcast %cst_66 : f32 to vector<16x128xf32>
    %138 = arith.maximumf %136, %137 : vector<16x128xf32>
    %c0_67 = arith.constant 0 : index
    %c0_68 = arith.constant 0 : index
    %139 = vector.load %arg14[%c0_67, %c0_68] : memref<16x128xf32, #tpu.memory_space<vmem>>, vector<16x128xf32>
    tpu.vector_store %arg14[%c0_67, %c0_68], %138 {strides = array<i32>} : memref<16x128xf32, #tpu.memory_space<vmem>>, vector<16x128xf32>,
    return
  }
}

</mosaic_0001>

<llo_original>
// kernel: tpu_custom_call.1
$region0: #{tpu_custom_call.1}
  #allocation0 [shape = 'u32[]', space=smem, size = 0x4, offset = 0x4, fixed_abs, tag = 'smem constant byte address 0x4 - core index']
  #allocation1 [shape = 'u32[144,128]{1,0:T(1,128)}', space=vmem, size = 0x12000, scoped, tag = 'internal scratch']
  #allocation2 [shape = 'bf16[16,96]{1,0:T(8,128)(2,1)}', space=vmem, size = 0x1000, scoped, tag = 'scratch operand']
  %s0 = inlined_call_operand.vmem [shape: f32[16,128], index: 0, kind: input, shape index: {}]
  %s1 = inlined_call_operand.vmem [shape: bf16[128,32], index: 1, kind: input, shape index: {}]
  %s2 = inlined_call_operand.vmem [shape: f32[1,32], index: 2, kind: input, shape index: {}]
  %s3 = inlined_call_operand.vmem [shape: f32[1,32], index: 3, kind: input, shape index: {}]
  %s4 = inlined_call_operand.vmem [shape: bf16[96,32], index: 4, kind: input, shape index: {}]
  %s5 = inlined_call_operand.vmem [shape: f32[1,32], index: 5, kind: input, shape index: {}]
  %s6 = inlined_call_operand.vmem [shape: f32[1,32], index: 6, kind: input, shape index: {}]
  %s7 = inlined_call_operand.vmem [shape: bf16[32,128], index: 7, kind: input, shape index: {}]
  %s8 = inlined_call_operand.vmem [shape: f32[1,128], index: 8, kind: input, shape index: {}]
  %s9 = inlined_call_operand.vmem [shape: f32[1,128], index: 9, kind: input, shape index: {}]
  %s10 = inlined_call_operand.vmem [shape: f32[32,4], index: 10, kind: input, shape index: {}]
  %s11 = inlined_call_operand.vmem [shape: f32[4,32], index: 11, kind: input, shape index: {}]
  %s12 = inlined_call_operand.vmem [shape: f32[128,16], index: 12, kind: input, shape index: {}]
  %s13 = inlined_call_operand.vmem [shape: f32[16,128], index: 13, kind: input, shape index: {}]
  %s14 = inlined_call_operand.hbm [shape: f32[16,128], index: 14, kind: output, shape index: {}]
  %s15 = sld [smem:[#allocation0]]
  $region66: #{tpu_custom_call.1} parent=0
    _
  %s17 = ssub.s32 1, %s15
  %s18 = scalar_select 0, %s17, %s15
  $region1: #{tpu_custom_call.1} parent=0
    #allocation3 [shape = 'u8[8192]{0}', space=vmem, size = 0x2000, scoped, tag = 'output window, operand 0, single buffered']
    #allocation4 [shape = 's32[1]{0}', space=sflag, size = 0x4, scoped, tag = 'scoped memory for tpu_custom_call.1']
    %19 = vsyncpa [#allocation4], 0
    // Predicated region
    $region2: #{tpu_custom_call.1} parent=1 // pred_check
      _
    $region3: #{tpu_custom_call.1} parent=1 // pred_check_branch
      %21 = sbr.rel (0) target = $region5
    $region4: #{tpu_custom_call.1} parent=1 // pred_region
      _
    $region5: #{tpu_custom_call.1} parent=1 // pred_fallthru
      _
    // Predicated region
    $region6: #{tpu_custom_call.1} parent=1 // pred_check
      _
    $region7: #{tpu_custom_call.1} parent=1 // pred_check_branch
      %23 = sbr.rel (0) target = $region9
    $region8: #{tpu_custom_call.1} parent=1 // pred_region
      _
    $region9: #{tpu_custom_call.1} parent=1 // pred_fallthru
      _
    // Predicated region
    $region10: #{tpu_custom_call.1} parent=1 // pred_check
      _
    $region11: #{tpu_custom_call.1} parent=1 // pred_check_branch
      %25 = sbr.rel (0) target = $region13
    $region12: #{tpu_custom_call.1} parent=1 // pred_region
      _
    $region13: #{tpu_custom_call.1} parent=1 // pred_fallthru
      _
    // Predicated region
    $region14: #{tpu_custom_call.1} parent=1 // pred_check
      _
    $region15: #{tpu_custom_call.1} parent=1 // pred_check_branch
      %27 = sbr.rel (0) target = $region17
    $region16: #{tpu_custom_call.1} parent=1 // pred_region
      _
    $region17: #{tpu_custom_call.1} parent=1 // pred_fallthru
      _
    // Predicated region
    $region18: #{tpu_custom_call.1} parent=1 // pred_check
      _
    $region19: #{tpu_custom_call.1} parent=1 // pred_check_branch
      %29 = sbr.rel (0) target = $region21
    $region20: #{tpu_custom_call.1} parent=1 // pred_region
      _
    $region21: #{tpu_custom_call.1} parent=1 // pred_fallthru
      _
    // Predicated region
    $region22: #{tpu_custom_call.1} parent=1 // pred_check
      _
    $region23: #{tpu_custom_call.1} parent=1 // pred_check_branch
      %31 = sbr.rel (0) target = $region25
    $region24: #{tpu_custom_call.1} parent=1 // pred_region
      _
    $region25: #{tpu_custom_call.1} parent=1 // pred_fallthru
      _
    // Predicated region
    $region26: #{tpu_custom_call.1} parent=1 // pred_check
      _
    $region27: #{tpu_custom_call.1} parent=1 // pred_check_branch
      %33 = sbr.rel (0) target = $region29
    $region28: #{tpu_custom_call.1} parent=1 // pred_region
      _
    $region29: #{tpu_custom_call.1} parent=1 // pred_fallthru
      _
    // Predicated region
    $region30: #{tpu_custom_call.1} parent=1 // pred_check
      _
    $region31: #{tpu_custom_call.1} parent=1 // pred_check_branch
      %35 = sbr.rel (0) target = $region33
    $region32: #{tpu_custom_call.1} parent=1 // pred_region
      _
    $region33: #{tpu_custom_call.1} parent=1 // pred_fallthru
      _
    // Predicated region
    $region34: #{tpu_custom_call.1} parent=1 // pred_check
      _
    $region35: #{tpu_custom_call.1} parent=1 // pred_check_branch
      %37 = sbr.rel (0) target = $region37
    $region36: #{tpu_custom_call.1} parent=1 // pred_region
      _
    $region37: #{tpu_custom_call.1} parent=1 // pred_fallthru
      _
    // Predicated region
    $region38: #{tpu_custom_call.1} parent=1 // pred_check
      _
    $region39: #{tpu_custom_call.1} parent=1 // pred_check_branch
      %39 = sbr.rel (0) target = $region41
    $region40: #{tpu_custom_call.1} parent=1 // pred_region
      _
    $region41: #{tpu_custom_call.1} parent=1 // pred_fallthru
      _
    // Predicated region
    $region42: #{tpu_custom_call.1} parent=1 // pred_check
      _
    $region43: #{tpu_custom_call.1} parent=1 // pred_check_branch
      %41 = sbr.rel (0) target = $region45
    $region44: #{tpu_custom_call.1} parent=1 // pred_region
      _
    $region45: #{tpu_custom_call.1} parent=1 // pred_fallthru
      _
    // Predicated region
    $region46: #{tpu_custom_call.1} parent=1 // pred_check
      _
    $region47: #{tpu_custom_call.1} parent=1 // pred_check_branch
      %43 = sbr.rel (0) target = $region49
    $region48: #{tpu_custom_call.1} parent=1 // pred_region
      _
    $region49: #{tpu_custom_call.1} parent=1 // pred_fallthru
      _
    // Predicated region
    $region50: #{tpu_custom_call.1} parent=1 // pred_check
      _
    $region51: #{tpu_custom_call.1} parent=1 // pred_check_branch
      %45 = sbr.rel (0) target = $region53
    $region52: #{tpu_custom_call.1} parent=1 // pred_region
      _
    $region53: #{tpu_custom_call.1} parent=1 // pred_fallthru
      _
    // Predicated region
    $region54: #{tpu_custom_call.1} parent=1 // pred_check
      _
    $region55: #{tpu_custom_call.1} parent=1 // pred_check_branch
      %47 = sbr.rel (0) target = $region57
    $region56: #{tpu_custom_call.1} parent=1 // pred_region
      _
    $region57: #{tpu_custom_call.1} parent=1 // pred_fallthru
      _
    %v49 = vld [vmem:[%s0] sm:$0xff]
    %v50 = vld [vmem:[%s0 + $0x8] sm:$0xff]
    %v51 = vpack.c.bf16 %v50, %v49
    %v52 = vld [vmem:[%s1] sm:$0xf]
    %v53 = vld [vmem:[%s1 + $0x4] sm:$0xf]
    %v54 = vld [vmem:[%s1 + $0x8] sm:$0xf]
    %v55 = vld [vmem:[%s1 + $0xc] sm:$0xf]
    %v56 = vld [vmem:[%s1 + $0x10] sm:$0xf]
    %v57 = vld [vmem:[%s1 + $0x14] sm:$0xf]
    %v58 = vld [vmem:[%s1 + $0x18] sm:$0xf]
    %v59 = vld [vmem:[%s1 + $0x1c] sm:$0xf]
    %v60 = vld [vmem:[%s1 + $0x20] sm:$0xf]
    %v61 = vld [vmem:[%s1 + $0x24] sm:$0xf]
    %v62 = vld [vmem:[%s1 + $0x28] sm:$0xf]
    %v63 = vld [vmem:[%s1 + $0x2c] sm:$0xf]
    %v64 = vld [vmem:[%s1 + $0x30] sm:$0xf]
    %v65 = vld [vmem:[%s1 + $0x34] sm:$0xf]
    %v66 = vld [vmem:[%s1 + $0x38] sm:$0xf]
    %v67 = vld [vmem:[%s1 + $0x3c] sm:$0xf]
    %v84 = vunpack.c.l.b16 %v52
    %v85 = vunpack.c.l.b16 %v53
    %v86 = vunpack.c.l.b16 %v54
    %v87 = vunpack.c.l.b16 %v55
    %v88 = vunpack.c.l.b16 %v56
    %v89 = vunpack.c.l.b16 %v57
    %v90 = vunpack.c.l.b16 %v58
    %v91 = vunpack.c.l.b16 %v59
    %v92 = vunpack.c.l.b16 %v60
    %v93 = vunpack.c.l.b16 %v61
    %v94 = vunpack.c.l.b16 %v62
    %v95 = vunpack.c.l.b16 %v63
    %v96 = vunpack.c.l.b16 %v64
    %v97 = vunpack.c.l.b16 %v65
    %v98 = vunpack.c.l.b16 %v66
    %v99 = vunpack.c.l.b16 %v67
    %v100 = vpack.c.b16 %v85, %v84
    %v101 = vpack.c.b16 %v87, %v86
    %v102 = vpack.c.b16 %v89, %v88
    %v103 = vpack.c.b16 %v91, %v90
    %v104 = vpack.c.b16 %v93, %v92
    %v105 = vpack.c.b16 %v95, %v94
    %v106 = vpack.c.b16 %v97, %v96
    %v107 = vpack.c.b16 %v99, %v98
    %116 = vmatprep.subr.bf16.mxu0 0
    %117 = vmatpush1.bf16.msra.mxu0 %v107
    %118 = vmatprep.subr.bf16.mxu0 0
    %119 = vmatpush1.bf16.msra.mxu0 %v106
    %120 = vmatprep.subr.bf16.mxu0 0
    %121 = vmatpush1.bf16.msra.mxu0 %v105
    %122 = vmatprep.subr.bf16.mxu0 0
    %123 = vmatpush1.bf16.msra.mxu0 %v104
    %124 = vmatprep.subr.bf16.mxu0 0
    %125 = vmatpush1.bf16.msra.mxu0 %v103
    %126 = vmatprep.subr.bf16.mxu0 0
    %127 = vmatpush1.bf16.msra.mxu0 %v102
    %128 = vmatprep.subr.bf16.mxu0 0
    %129 = vmatpush1.bf16.msra.mxu0 %v101
    %130 = vmatprep.subr.bf16.mxu0 0
    %131 = vmatpush1.bf16.msra.mxu0 %v100
    %132 = vmatprep.subr.bf16.mxu0 0
    %133 = vmatpush2.bf16.msra.mxu0 0
    %134 = vmatprep.subr.bf16.mxu0 0
    %135 = vmatpush2.bf16.msra.mxu0 0
    %136 = vmatprep.subr.bf16.mxu0 0
    %137 = vmatpush2.bf16.msra.mxu0 0
    %138 = vmatprep.subr.bf16.mxu0 0
    %139 = vmatpush2.bf16.msra.mxu0 0
    %140 = vmatprep.subr.bf16.mxu0 0
    %141 = vmatpush2.bf16.msra.mxu0 0
    %142 = vmatprep.subr.bf16.mxu0 0
    %143 = vmatpush2.bf16.msra.mxu0 0
    %144 = vmatprep.subr.bf16.mxu0 0
    %145 = vmatpush2.bf16.msra.mxu0 0
    %146 = vmatprep.subr.bf16.mxu0 0
    %147 = vmatpush2.bf16.msra.mxu0 0
    %148 = vmatprep.mubr.bf16.mxu0 0
    %149 = vmatmul.mubr.bf16.gmra.mxu0 %v51
    %v150 = vpop.f32.mrf.mxu0
    %v151 = vadd.f32 0.0, %v150
    %v152 = vpop.f32.mrf.mxu0
    %v153 = vpop.f32.mrf.mxu0
    %v154 = vadd.f32 0.0, %v153
    %v155 = vpop.f32.mrf.mxu0
    %156 = vdwg.mxu0
    %vm157 = vcmask 261120
    %v158 = vsel %vm157, %v151, 0.0
    %v159 = vsel %vm157, %v154, 0.0
    %v160 = vadd.f32 %v158, %v159
    %v161 = vrot.slane %v160, 4
    %v162 = vadd.f32 %v160, %v161
    %v163 = vrot.slane %v162, 2
    %v164 = vadd.f32 %v162, %v163
    %v165 = vrot.slane %v164, 1
    %v166 = vadd.f32 %v164, %v165
    %v167 = vmul.f32 %v151, %v151
    %v168 = vmul.f32 %v154, %v154
    %v169 = vsel %vm157, %v167, 0.0
    %v170 = vsel %vm157, %v168, 0.0
    %v171 = vadd.f32 %v169, %v170
    %v172 = vrot.slane %v171, 4
    %v173 = vadd.f32 %v171, %v172
    %v174 = vrot.slane %v173, 2
    %v175 = vadd.f32 %v173, %v174
    %v176 = vrot.slane %v175, 1
    %v177 = vadd.f32 %v175, %v176
    %vm178 = vcmask 1040384
    %v179 = vsel %vm178, %v166, %v177
    %v180 = vld [vmem:[%s10] sm:$0xff]
    %v181 = vld [vmem:[%s10 + $0x8] sm:$0xff]
    %v182 = vld [vmem:[%s10 + $0x10] sm:$0xff]
    %v183 = vld [vmem:[%s10 + $0x18] sm:$0xff]
    %v185 = vsel %vm157, %v179, 0
    %187 = vmatprep.subr.mxu0 0.0
    %188 = vmatpush1.msra.mxu0 0.0
    %189 = vmatprep.subr.mxu0 0.0
    %190 = vmatpush1.msra.mxu0 0.0
    %191 = vmatprep.subr.mxu0 0.0
    %192 = vmatpush1.msra.mxu0 0.0
    %193 = vmatprep.subr.mxu0 0.0
    %194 = vmatpush1.msra.mxu0 0.0
    %195 = vmatprep.subr.mxu0 0.0
    %196 = vmatpush1.msra.mxu0 0.0
    %197 = vmatprep.subr.mxu0 0.0
    %198 = vmatpush1.msra.mxu0 0.0
    %199 = vmatprep.subr.mxu0 0.0
    %200 = vmatpush1.msra.mxu0 0.0
    %201 = vmatprep.subr.mxu0 0.0
    %202 = vmatpush1.msra.mxu0 0.0
    %203 = vmatprep.subr.mxu0 0.0
    %204 = vmatpush1.msra.mxu0 0.0
    %205 = vmatprep.subr.mxu0 0.0
    %206 = vmatpush1.msra.mxu0 0.0
    %207 = vmatprep.subr.mxu0 0.0
    %208 = vmatpush1.msra.mxu0 0.0
    %209 = vmatprep.subr.mxu0 0.0
    %210 = vmatpush1.msra.mxu0 0.0
    %211 = vmatprep.subr.mxu0 0.0
    %212 = vmatpush1.msra.mxu0 %v183
    %213 = vmatprep.subr.mxu0 0.0
    %214 = vmatpush1.msra.mxu0 %v182
    %215 = vmatprep.subr.mxu0 0.0
    %216 = vmatpush1.msra.mxu0 %v181
    %217 = vmatprep.subr.mxu0 0.0
    %218 = vmatpush1.msra.mxu0 %v180
    %219 = vmatprep.subr.mxu0 0.0
    %220 = vmatpush2.msra.mxu0 0.0
    %221 = vmatprep.subr.mxu0 0.0
    %222 = vmatpush2.msra.mxu0 0.0
    %223 = vmatprep.subr.mxu0 0.0
    %224 = vmatpush2.msra.mxu0 0.0
    %225 = vmatprep.subr.mxu0 0.0
    %226 = vmatpush2.msra.mxu0 0.0
    %227 = vmatprep.subr.mxu0 0.0
    %228 = vmatpush2.msra.mxu0 0.0
    %229 = vmatprep.subr.mxu0 0.0
    %230 = vmatpush2.msra.mxu0 0.0
    %231 = vmatprep.subr.mxu0 0.0
    %232 = vmatpush2.msra.mxu0 0.0
    %233 = vmatprep.subr.mxu0 0.0
    %234 = vmatpush2.msra.mxu0 0.0
    %235 = vmatprep.subr.mxu0 0.0
    %236 = vmatpush2.msra.mxu0 0.0
    %237 = vmatprep.subr.mxu0 0.0
    %238 = vmatpush2.msra.mxu0 0.0
    %239 = vmatprep.subr.mxu0 0.0
    %240 = vmatpush2.msra.mxu0 0.0
    %241 = vmatprep.subr.mxu0 0.0
    %242 = vmatpush2.msra.mxu0 0.0
    %243 = vmatprep.subr.mxu0 0.0
    %244 = vmatpush2.msra.mxu0 0.0
    %245 = vmatprep.subr.mxu0 0.0
    %246 = vmatpush2.msra.mxu0 0.0
    %247 = vmatprep.subr.mxu0 0.0
    %248 = vmatpush2.msra.mxu0 0.0
    %249 = vmatprep.subr.mxu0 0.0
    %250 = vmatpush2.msra.mxu0 0.0
    %251 = vmatprep.mubr.f32.mxu0 0.0
    %252 = vmatmul.mubr.f32.gmra.mxu0 %v185
    %v253 = vpop.f32.mrf.mxu0
    %v254 = vadd.f32 0.0, %v253
    %v255 = vpop.f32.mrf.mxu0
    %256 = vdwg.mxu0
    %v257 = vmul.f32 %v254, 0.0078125
    %v258 = vld [vmem:[%s11] sm:$0xf]
    %vm259 = vcmask 31744
    %v261 = vsel %vm259, %v257, 0
    %vm263 = vcmask 1043456
    %v265 = vsel %vm263, %v258, 0
    %267 = vmatprep.subr.mxu0 0.0
    %268 = vmatpush1.msra.mxu0 0.0
    %269 = vmatprep.subr.mxu0 0.0
    %270 = vmatpush1.msra.mxu0 0.0
    %271 = vmatprep.subr.mxu0 0.0
    %272 = vmatpush1.msra.mxu0 0.0
    %273 = vmatprep.subr.mxu0 0.0
    %274 = vmatpush1.msra.mxu0 0.0
    %275 = vmatprep.subr.mxu0 0.0
    %276 = vmatpush1.msra.mxu0 0.0
    %277 = vmatprep.subr.mxu0 0.0
    %278 = vmatpush1.msra.mxu0 0.0
    %279 = vmatprep.subr.mxu0 0.0
    %280 = vmatpush1.msra.mxu0 0.0
    %281 = vmatprep.subr.mxu0 0.0
    %282 = vmatpush1.msra.mxu0 0.0
    %283 = vmatprep.subr.mxu0 0.0
    %284 = vmatpush1.msra.mxu0 0.0
    %285 = vmatprep.subr.mxu0 0.0
    %286 = vmatpush1.msra.mxu0 0.0
    %287 = vmatprep.subr.mxu0 0.0
    %288 = vmatpush1.msra.mxu0 0.0
    %289 = vmatprep.subr.mxu0 0.0
    %290 = vmatpush1.msra.mxu0 0.0
    %291 = vmatprep.subr.mxu0 0.0
    %292 = vmatpush1.msra.mxu0 0.0
    %293 = vmatprep.subr.mxu0 0.0
    %294 = vmatpush1.msra.mxu0 0.0
    %295 = vmatprep.subr.mxu0 0.0
    %296 = vmatpush1.msra.mxu0 0.0
    %297 = vmatprep.subr.mxu0 0.0
    %298 = vmatpush1.msra.mxu0 %v265
    %299 = vmatprep.subr.mxu0 0.0
    %300 = vmatpush2.msra.mxu0 0.0
    %301 = vmatprep.subr.mxu0 0.0
    %302 = vmatpush2.msra.mxu0 0.0
    %303 = vmatprep.subr.mxu0 0.0
    %304 = vmatpush2.msra.mxu0 0.0
    %305 = vmatprep.subr.mxu0 0.0
    %306 = vmatpush2.msra.mxu0 0.0
    %307 = vmatprep.subr.mxu0 0.0
    %308 = vmatpush2.msra.mxu0 0.0
    %309 = vmatprep.subr.mxu0 0.0
    %310 = vmatpush2.msra.mxu0 0.0
    %311 = vmatprep.subr.mxu0 0.0
    %312 = vmatpush2.msra.mxu0 0.0
    %313 = vmatprep.subr.mxu0 0.0
    %314 = vmatpush2.msra.mxu0 0.0
    %315 = vmatprep.subr.mxu0 0.0
    %316 = vmatpush2.msra.mxu0 0.0
    %317 = vmatprep.subr.mxu0 0.0
    %318 = vmatpush2.msra.mxu0 0.0
    %319 = vmatprep.subr.mxu0 0.0
    %320 = vmatpush2.msra.mxu0 0.0
    %321 = vmatprep.subr.mxu0 0.0
    %322 = vmatpush2.msra.mxu0 0.0
    %323 = vmatprep.subr.mxu0 0.0
    %324 = vmatpush2.msra.mxu0 0.0
    %325 = vmatprep.subr.mxu0 0.0
    %326 = vmatpush2.msra.mxu0 0.0
    %327 = vmatprep.subr.mxu0 0.0
    %328 = vmatpush2.msra.mxu0 0.0
    %329 = vmatprep.subr.mxu0 0.0
    %330 = vmatpush2.msra.mxu0 0.0
    %331 = vmatprep.mubr.f32.mxu0 0.0
    %332 = vmatmul.mubr.f32.gmra.mxu0 %v261
    %v333 = vpop.f32.mrf.mxu0
    %v334 = vadd.f32 0.0, %v333
    %v335 = vpop.f32.mrf.mxu0
    %336 = vdwg.mxu0
    %v337 = vmul.f32 %v334, %v334
    %v339 = vrot.slane %v337, 7
    %v341 = vsub.f32 %v334, %v339
    %v342 = vld [vmem:[%s2] sm:$0x1]
    %v343 = vadd.f32 %v341, 1e-05
    %v344 = vrsqrt.pop %v343
    %v347 = vunpack.c.l.s4 1966171168
    %v348 = vunpack.c.0.s8 %v347
    %v349 = vlaneseq
    %v350 = vshrl.u32 %v349, 7
    %v351 = vsub.s32 %v348, %v350
    %v352 = vrot.slane %v344, %v351
    %v353 = vcombine.high %v352, %v352
    %v355 = vunpack.c.l.s4 1966171168
    %v356 = vunpack.c.0.s8 %v355
    %v357 = vlaneseq
    %v358 = vshrl.u32 %v357, 7
    %v359 = vsub.s32 %v356, %v358
    %v360 = vrot.slane %v353, %v359
    %v362 = vmul.f32 %v342, %v360
    %v363 = vld [vmem:[%s3] sm:$0x1]
    %v364 = vmul.f32 %v334, %v362
    %v365 = vsub.f32 %v363, %v364
    %v367 = vlaneseq
    %v368 = vshrl.u32 %v367, 7
    %v369 = vsub.s32 0, %v368
    %v370 = vrot.slane %v362, %v369
    %v372 = vmul.f32 %v151, %v370
    %v373 = vmul.f32 %v154, %v370
    %v375 = vlaneseq
    %v376 = vshrl.u32 %v375, 7
    %v377 = vsub.s32 0, %v376
    %v378 = vrot.slane %v365, %v377
    %v380 = vadd.f32 %v372, %v378
    %v381 = vadd.f32 %v373, %v378
    %v382 = vmax.f32 %v380, 0.0
    %v383 = vmax.f32 %v381, 0.0
    %v384 = vlaneseq
    %v385 = vshrl.u32 %v384, 7
    %v386 = vadd.s32 %v385, 8
    %vm387 = vcmp.lt.s32.totalorder %v385, 0
    %v388 = vsub.s32 0, %v385
    %v389 = vsel %vm387, %v388, %v385
    %v390 = vshrl.u32 %v389, 3
    %v391 = vand.u32 %v389, 7
    %v392 = vsub.s32 0, %v391
    %v393 = vsel %vm387, %v392, %v391
    %vm394 = vcmp.lt.s32.totalorder %v386, 0
    %v395 = vsub.s32 0, %v386
    %v396 = vsel %vm394, %v395, %v386
    %v397 = vshrl.u32 %v396, 3
    %v398 = vand.u32 %v396, 7
    %v399 = vsub.s32 0, %v398
    %v400 = vsel %vm394, %v399, %v398
    %vm401 = vcmp.ne.s32.totalorder %v393, 0
    %vm402 = vcmp.ne.s32.totalorder %v400, 0
    %vm403 = vcmp.lt.s32.totalorder %v393, 0
    %vm404 = vcmp.lt.s32.totalorder %v400, 0
    %vm405 = vmand %vm403, %vm401
    %vm406 = vmand %vm404, %vm402
    %v407 = vadd.s32 %v393, 8
    %v408 = vadd.s32 %v400, 8
    %v409 = vsel %vm405, %v407, %v393
    %v410 = vsel %vm406, %v408, %v400
    %vm411 = vcmp.lt.s32.totalorder %v409, 7
    %vm412 = vcmp.lt.s32.totalorder %v410, 7
    %v413 = vsel %vm411, 1, 0
    %v414 = vsel %vm412, 1, 0
    %v415 = vcvt.s32.f32 %v413
    %v416 = vcvt.s32.f32 %v414
    %vm417 = vcmp.gt.s32.totalorder %v409, 0
    %vm418 = vcmp.gt.s32.totalorder %v410, 0
    %v419 = vsel %vm417, 1, 0
    %v420 = vsel %vm418, 1, 0
    %v421 = vcvt.s32.f32 %v419
    %v422 = vcvt.s32.f32 %v420
    %v423 = vrot.slane %v382, 1
    %v424 = vrot.slane %v383, 1
    %vm425 = vcmp.lt.s32.totalorder %v385, 7
    %v426 = vsel %vm425, %v423, %v424
    %v427 = vsel %vm425, %v424, %v423
    %v428 = vmul.f32 %v426, %v415
    %v429 = vmul.f32 %v427, %v416
    %v430 = vrot.slane %v382, 7
    %v431 = vrot.slane %v383, 7
    %vm432 = vcmp.lt.s32.totalorder %v385, 1
    %v433 = vsel %vm432, %v430, %v431
    %v434 = vsel %vm432, %v431, %v430
    %v435 = vmul.f32 %v434, %v421
    %v436 = vmul.f32 %v433, %v422
    %v437 = vpack.c.bf16 %v436, %v435
    %v439 = vunpack.c.l.b16 %v437
    %v440 = vunpack.c.h.b16 %v437
    %v441 = vpack.c.b16 %v439, %v439
    %v442 = vpack.c.b16 %v440, %v440
    %vm445 = vcmask 257024
    %446 = vst.msk [vmem:[#allocation2] sm:$0xf] %vm445, %v441
    %447 = vst.msk [vmem:[#allocation2 + $0x4] sm:$0xf] %vm445, %v442
    %v448 = vpack.c.bf16 %v383, %v382
    %v450 = vunpack.c.l.b16 %v448
    %v451 = vunpack.c.h.b16 %v448
    %v452 = vpack.c.b16 %v450, %v450
    %v453 = vpack.c.b16 %v451, %v451
    %454 = vrot.lane.b32.xlu0 %v452, 32
    %v455 = vpop.permute.xlu0 %454
    %456 = vrot.lane.b32.xlu0 %v453, 32
    %v457 = vpop.permute.xlu0 %456
    %vm460 = vcmask 519424
    %461 = vst.msk [vmem:[#allocation2] sm:$0xf] %vm460, %v455
    %462 = vst.msk [vmem:[#allocation2 + $0x4] sm:$0xf] %vm460, %v457
    %v463 = vpack.c.bf16 %v429, %v428
    %v465 = vunpack.c.l.b16 %v463
    %v466 = vunpack.c.h.b16 %v463
    %v467 = vpack.c.b16 %v465, %v465
    %v468 = vpack.c.b16 %v466, %v466
    %469 = vrot.lane.b32.xlu0 %v467, 64
    %v470 = vpop.permute.xlu0 %469
    %471 = vrot.lane.b32.xlu0 %v468, 64
    %v472 = vpop.permute.xlu0 %471
    %vm475 = vcmask 781824
    %476 = vst.msk [vmem:[#allocation2] sm:$0xf] %vm475, %v470
    %477 = vst.msk [vmem:[#allocation2 + $0x4] sm:$0xf] %vm475, %v472
    %v478 = vld [vmem:[#allocation2] sm:$0xf]
    %v479 = vld [vmem:[#allocation2 + $0x4] sm:$0xf]
    %v480 = vld [vmem:[%s4] sm:$0xf]
    %v481 = vld [vmem:[%s4 + $0x4] sm:$0xf]
    %v482 = vld [vmem:[%s4 + $0x8] sm:$0xf]
    %v483 = vld [vmem:[%s4 + $0xc] sm:$0xf]
    %v484 = vld [vmem:[%s4 + $0x10] sm:$0xf]
    %v485 = vld [vmem:[%s4 + $0x14] sm:$0xf]
    %v486 = vld [vmem:[%s4 + $0x18] sm:$0xf]
    %v487 = vld [vmem:[%s4 + $0x1c] sm:$0xf]
    %v488 = vld [vmem:[%s4 + $0x20] sm:$0xf]
    %v489 = vld [vmem:[%s4 + $0x24] sm:$0xf]
    %v490 = vld [vmem:[%s4 + $0x28] sm:$0xf]
    %v491 = vld [vmem:[%s4 + $0x2c] sm:$0xf]
    %v494 = vunpack.c.l.b16 %v478
    %v495 = vunpack.c.l.b16 %v479
    %v496 = vpack.c.b16 %v495, %v494
    %v509 = vunpack.c.l.b16 %v480
    %v510 = vunpack.c.l.b16 %v481
    %v511 = vunpack.c.l.b16 %v482
    %v512 = vunpack.c.l.b16 %v483
    %v513 = vunpack.c.l.b16 %v484
    %v514 = vunpack.c.l.b16 %v485
    %v515 = vunpack.c.l.b16 %v486
    %v516 = vunpack.c.l.b16 %v487
    %v517 = vunpack.c.l.b16 %v488
    %v518 = vunpack.c.l.b16 %v489
    %v519 = vunpack.c.l.b16 %v490
    %v520 = vunpack.c.l.b16 %v491
    %v521 = vpack.c.b16 %v510, %v509
    %v522 = vpack.c.b16 %v512, %v511
    %v523 = vpack.c.b16 %v514, %v513
    %v524 = vpack.c.b16 %v516, %v515
    %v525 = vpack.c.b16 %v518, %v517
    %v526 = vpack.c.b16 %v520, %v519
    %vm533 = vcmask 785408
    %v535 = vsel %vm533, %v496, 0
    %537 = vmatprep.subr.bf16.mxu0 0
    %538 = vmatpush1.bf16.msra.mxu0 0
    %539 = vmatprep.subr.bf16.mxu0 0
    %540 = vmatpush1.bf16.msra.mxu0 0
    %541 = vmatprep.subr.bf16.mxu0 0
    %542 = vmatpush1.bf16.msra.mxu0 %v526
    %543 = vmatprep.subr.bf16.mxu0 0
    %544 = vmatpush1.bf16.msra.mxu0 %v525
    %545 = vmatprep.subr.bf16.mxu0 0
    %546 = vmatpush1.bf16.msra.mxu0 %v524
    %547 = vmatprep.subr.bf16.mxu0 0
    %548 = vmatpush1.bf16.msra.mxu0 %v523
    %549 = vmatprep.subr.bf16.mxu0 0
    %550 = vmatpush1.bf16.msra.mxu0 %v522
    %551 = vmatprep.subr.bf16.mxu0 0
    %552 = vmatpush1.bf16.msra.mxu0 %v521
    %553 = vmatprep.subr.bf16.mxu0 0
    %554 = vmatpush2.bf16.msra.mxu0 0
    %555 = vmatprep.subr.bf16.mxu0 0
    %556 = vmatpush2.bf16.msra.mxu0 0
    %557 = vmatprep.subr.bf16.mxu0 0
    %558 = vmatpush2.bf16.msra.mxu0 0
    %559 = vmatprep.subr.bf16.mxu0 0
    %560 = vmatpush2.bf16.msra.mxu0 0
    %561 = vmatprep.subr.bf16.mxu0 0
    %562 = vmatpush2.bf16.msra.mxu0 0
    %563 = vmatprep.subr.bf16.mxu0 0
    %564 = vmatpush2.bf16.msra.mxu0 0
    %565 = vmatprep.subr.bf16.mxu0 0
    %566 = vmatpush2.bf16.msra.mxu0 0
    %567 = vmatprep.subr.bf16.mxu0 0
    %568 = vmatpush2.bf16.msra.mxu0 0
    %569 = vmatprep.mubr.bf16.mxu0 0
    %570 = vmatmul.mubr.bf16.gmra.mxu0 %v535
    %v571 = vpop.f32.mrf.mxu0
    %v572 = vadd.f32 0.0, %v571
    %v573 = vpop.f32.mrf.mxu0
    %v574 = vpop.f32.mrf.mxu0
    %v575 = vadd.f32 0.0, %v574
    %v576 = vpop.f32.mrf.mxu0
    %577 = vdwg.mxu0
    %v578 = vsel %vm157, %v572, 0.0
    %v579 = vsel %vm157, %v575, 0.0
    %v580 = vadd.f32 %v578, %v579
    %v581 = vrot.slane %v580, 4
    %v582 = vadd.f32 %v580, %v581
    %v583 = vrot.slane %v582, 2
    %v584 = vadd.f32 %v582, %v583
    %v585 = vrot.slane %v584, 1
    %v586 = vadd.f32 %v584, %v585
    %v587 = vmul.f32 %v572, %v572
    %v588 = vmul.f32 %v575, %v575
    %v589 = vsel %vm157, %v587, 0.0
    %v590 = vsel %vm157, %v588, 0.0
    %v591 = vadd.f32 %v589, %v590
    %v592 = vrot.slane %v591, 4
    %v593 = vadd.f32 %v591, %v592
    %v594 = vrot.slane %v593, 2
    %v595 = vadd.f32 %v593, %v594
    %v596 = vrot.slane %v595, 1
    %v597 = vadd.f32 %v595, %v596
    %v598 = vsel %vm178, %v586, %v597
    %v599 = vld [vmem:[%s10] sm:$0xff]
    %v600 = vld [vmem:[%s10 + $0x8] sm:$0xff]
    %v601 = vld [vmem:[%s10 + $0x10] sm:$0xff]
    %v602 = vld [vmem:[%s10 + $0x18] sm:$0xff]
    %v604 = vsel %vm157, %v598, 0
    %606 = vmatprep.subr.mxu0 0.0
    %607 = vmatpush1.msra.mxu0 0.0
    %608 = vmatprep.subr.mxu0 0.0
    %609 = vmatpush1.msra.mxu0 0.0
    %610 = vmatprep.subr.mxu0 0.0
    %611 = vmatpush1.msra.mxu0 0.0
    %612 = vmatprep.subr.mxu0 0.0
    %613 = vmatpush1.msra.mxu0 0.0
    %614 = vmatprep.subr.mxu0 0.0
    %615 = vmatpush1.msra.mxu0 0.0
    %616 = vmatprep.subr.mxu0 0.0
    %617 = vmatpush1.msra.mxu0 0.0
    %618 = vmatprep.subr.mxu0 0.0
    %619 = vmatpush1.msra.mxu0 0.0
    %620 = vmatprep.subr.mxu0 0.0
    %621 = vmatpush1.msra.mxu0 0.0
    %622 = vmatprep.subr.mxu0 0.0
    %623 = vmatpush1.msra.mxu0 0.0
    %624 = vmatprep.subr.mxu0 0.0
    %625 = vmatpush1.msra.mxu0 0.0
    %626 = vmatprep.subr.mxu0 0.0
    %627 = vmatpush1.msra.mxu0 0.0
    %628 = vmatprep.subr.mxu0 0.0
    %629 = vmatpush1.msra.mxu0 0.0
    %630 = vmatprep.subr.mxu0 0.0
    %631 = vmatpush1.msra.mxu0 %v602
    %632 = vmatprep.subr.mxu0 0.0
    %633 = vmatpush1.msra.mxu0 %v601
    %634 = vmatprep.subr.mxu0 0.0
    %635 = vmatpush1.msra.mxu0 %v600
    %636 = vmatprep.subr.mxu0 0.0
    %637 = vmatpush1.msra.mxu0 %v599
    %638 = vmatprep.subr.mxu0 0.0
    %639 = vmatpush2.msra.mxu0 0.0
    %640 = vmatprep.subr.mxu0 0.0
    %641 = vmatpush2.msra.mxu0 0.0
    %642 = vmatprep.subr.mxu0 0.0
    %643 = vmatpush2.msra.mxu0 0.0
    %644 = vmatprep.subr.mxu0 0.0
    %645 = vmatpush2.msra.mxu0 0.0
    %646 = vmatprep.subr.mxu0 0.0
    %647 = vmatpush2.msra.mxu0 0.0
    %648 = vmatprep.subr.mxu0 0.0
    %649 = vmatpush2.msra.mxu0 0.0
    %650 = vmatprep.subr.mxu0 0.0
    %651 = vmatpush2.msra.mxu0 0.0
    %652 = vmatprep.subr.mxu0 0.0
    %653 = vmatpush2.msra.mxu0 0.0
    %654 = vmatprep.subr.mxu0 0.0
    %655 = vmatpush2.msra.mxu0 0.0
    %656 = vmatprep.subr.mxu0 0.0
    %657 = vmatpush2.msra.mxu0 0.0
    %658 = vmatprep.subr.mxu0 0.0
    %659 = vmatpush2.msra.mxu0 0.0
    %660 = vmatprep.subr.mxu0 0.0
    %661 = vmatpush2.msra.mxu0 0.0
    %662 = vmatprep.subr.mxu0 0.0
    %663 = vmatpush2.msra.mxu0 0.0
    %664 = vmatprep.subr.mxu0 0.0
    %665 = vmatpush2.msra.mxu0 0.0
    %666 = vmatprep.subr.mxu0 0.0
    %667 = vmatpush2.msra.mxu0 0.0
    %668 = vmatprep.subr.mxu0 0.0
    %669 = vmatpush2.msra.mxu0 0.0
    %670 = vmatprep.mubr.f32.mxu0 0.0
    %671 = vmatmul.mubr.f32.gmra.mxu0 %v604
    %v672 = vpop.f32.mrf.mxu0
    %v673 = vadd.f32 0.0, %v672
    %v674 = vpop.f32.mrf.mxu0
    %675 = vdwg.mxu0
    %v676 = vmul.f32 %v673, 0.0078125
    %v677 = vld [vmem:[%s11] sm:$0xf]
    %v679 = vsel %vm259, %v676, 0
    %v682 = vsel %vm263, %v677, 0
    %684 = vmatprep.subr.mxu0 0.0
    %685 = vmatpush1.msra.mxu0 0.0
    %686 = vmatprep.subr.mxu0 0.0
    %687 = vmatpush1.msra.mxu0 0.0
    %688 = vmatprep.subr.mxu0 0.0
    %689 = vmatpush1.msra.mxu0 0.0
    %690 = vmatprep.subr.mxu0 0.0
    %691 = vmatpush1.msra.mxu0 0.0
    %692 = vmatprep.subr.mxu0 0.0
    %693 = vmatpush1.msra.mxu0 0.0
    %694 = vmatprep.subr.mxu0 0.0
    %695 = vmatpush1.msra.mxu0 0.0
    %696 = vmatprep.subr.mxu0 0.0
    %697 = vmatpush1.msra.mxu0 0.0
    %698 = vmatprep.subr.mxu0 0.0
    %699 = vmatpush1.msra.mxu0 0.0
    %700 = vmatprep.subr.mxu0 0.0
    %701 = vmatpush1.msra.mxu0 0.0
    %702 = vmatprep.subr.mxu0 0.0
    %703 = vmatpush1.msra.mxu0 0.0
    %704 = vmatprep.subr.mxu0 0.0
    %705 = vmatpush1.msra.mxu0 0.0
    %706 = vmatprep.subr.mxu0 0.0
    %707 = vmatpush1.msra.mxu0 0.0
    %708 = vmatprep.subr.mxu0 0.0
    %709 = vmatpush1.msra.mxu0 0.0
    %710 = vmatprep.subr.mxu0 0.0
    %711 = vmatpush1.msra.mxu0 0.0
    %712 = vmatprep.subr.mxu0 0.0
    %713 = vmatpush1.msra.mxu0 0.0
    %714 = vmatprep.subr.mxu0 0.0
    %715 = vmatpush1.msra.mxu0 %v682
    %716 = vmatprep.subr.mxu0 0.0
    %717 = vmatpush2.msra.mxu0 0.0
    %718 = vmatprep.subr.mxu0 0.0
    %719 = vmatpush2.msra.mxu0 0.0
    %720 = vmatprep.subr.mxu0 0.0
    %721 = vmatpush2.msra.mxu0 0.0
    %722 = vmatprep.subr.mxu0 0.0
    %723 = vmatpush2.msra.mxu0 0.0
    %724 = vmatprep.subr.mxu0 0.0
    %725 = vmatpush2.msra.mxu0 0.0
    %726 = vmatprep.subr.mxu0 0.0
    %727 = vmatpush2.msra.mxu0 0.0
    %728 = vmatprep.subr.mxu0 0.0
    %729 = vmatpush2.msra.mxu0 0.0
    %730 = vmatprep.subr.mxu0 0.0
    %731 = vmatpush2.msra.mxu0 0.0
    %732 = vmatprep.subr.mxu0 0.0
    %733 = vmatpush2.msra.mxu0 0.0
    %734 = vmatprep.subr.mxu0 0.0
    %735 = vmatpush2.msra.mxu0 0.0
    %736 = vmatprep.subr.mxu0 0.0
    %737 = vmatpush2.msra.mxu0 0.0
    %738 = vmatprep.subr.mxu0 0.0
    %739 = vmatpush2.msra.mxu0 0.0
    %740 = vmatprep.subr.mxu0 0.0
    %741 = vmatpush2.msra.mxu0 0.0
    %742 = vmatprep.subr.mxu0 0.0
    %743 = vmatpush2.msra.mxu0 0.0
    %744 = vmatprep.subr.mxu0 0.0
    %745 = vmatpush2.msra.mxu0 0.0
    %746 = vmatprep.subr.mxu0 0.0
    %747 = vmatpush2.msra.mxu0 0.0
    %748 = vmatprep.mubr.f32.mxu0 0.0
    %749 = vmatmul.mubr.f32.gmra.mxu0 %v679
    %v750 = vpop.f32.mrf.mxu0
    %v751 = vadd.f32 0.0, %v750
    %v752 = vpop.f32.mrf.mxu0
    %753 = vdwg.mxu0
    %v754 = vmul.f32 %v751, %v751
    %v756 = vrot.slane %v754, 7
    %v758 = vsub.f32 %v751, %v756
    %v759 = vld [vmem:[%s5] sm:$0x1]
    %v760 = vadd.f32 %v758, 1e-05
    %v761 = vrsqrt.pop %v760
    %v764 = vunpack.c.l.s4 1966171168
    %v765 = vunpack.c.0.s8 %v764
    %v766 = vlaneseq
    %v767 = vshrl.u32 %v766, 7
    %v768 = vsub.s32 %v765, %v767
    %v769 = vrot.slane %v761, %v768
    %v770 = vcombine.high %v769, %v769
    %v772 = vunpack.c.l.s4 1966171168
    %v773 = vunpack.c.0.s8 %v772
    %v774 = vlaneseq
    %v775 = vshrl.u32 %v774, 7
    %v776 = vsub.s32 %v773, %v775
    %v777 = vrot.slane %v770, %v776
    %v779 = vmul.f32 %v759, %v777
    %v780 = vld [vmem:[%s6] sm:$0x1]
    %v781 = vmul.f32 %v751, %v779
    %v782 = vsub.f32 %v780, %v781
    %v784 = vlaneseq
    %v785 = vshrl.u32 %v784, 7
    %v786 = vsub.s32 0, %v785
    %v787 = vrot.slane %v779, %v786
    %v789 = vmul.f32 %v572, %v787
    %v790 = vmul.f32 %v575, %v787
    %v792 = vlaneseq
    %v793 = vshrl.u32 %v792, 7
    %v794 = vsub.s32 0, %v793
    %v795 = vrot.slane %v782, %v794
    %v797 = vadd.f32 %v789, %v795
    %v798 = vadd.f32 %v790, %v795
    %v799 = vmax.f32 %v797, 0.0
    %v800 = vmax.f32 %v798, 0.0
    %v801 = vpack.c.bf16 %v800, %v799
    %v802 = vld [vmem:[%s7] sm:$0xf]
    %v803 = vld [vmem:[%s7 + $0x4] sm:$0xf]
    %v804 = vld [vmem:[%s7 + $0x8] sm:$0xf]
    %v805 = vld [vmem:[%s7 + $0xc] sm:$0xf]
    %v810 = vunpack.c.l.b16 %v802
    %v811 = vunpack.c.l.b16 %v803
    %v812 = vunpack.c.l.b16 %v804
    %v813 = vunpack.c.l.b16 %v805
    %v814 = vpack.c.b16 %v811, %v810
    %v815 = vpack.c.b16 %v813, %v812
    %v819 = vsel %vm157, %v801, 0
    %821 = vmatprep.subr.bf16.mxu0 0
    %822 = vmatpush1.bf16.msra.mxu0 0
    %823 = vmatprep.subr.bf16.mxu0 0
    %824 = vmatpush1.bf16.msra.mxu0 0
    %825 = vmatprep.subr.bf16.mxu0 0
    %826 = vmatpush1.bf16.msra.mxu0 0
    %827 = vmatprep.subr.bf16.mxu0 0
    %828 = vmatpush1.bf16.msra.mxu0 0
    %829 = vmatprep.subr.bf16.mxu0 0
    %830 = vmatpush1.bf16.msra.mxu0 0
    %831 = vmatprep.subr.bf16.mxu0 0
    %832 = vmatpush1.bf16.msra.mxu0 0
    %833 = vmatprep.subr.bf16.mxu0 0
    %834 = vmatpush1.bf16.msra.mxu0 %v815
    %835 = vmatprep.subr.bf16.mxu0 0
    %836 = vmatpush1.bf16.msra.mxu0 %v814
    %837 = vmatprep.subr.bf16.mxu0 0
    %838 = vmatpush2.bf16.msra.mxu0 0
    %839 = vmatprep.subr.bf16.mxu0 0
    %840 = vmatpush2.bf16.msra.mxu0 0
    %841 = vmatprep.subr.bf16.mxu0 0
    %842 = vmatpush2.bf16.msra.mxu0 0
    %843 = vmatprep.subr.bf16.mxu0 0
    %844 = vmatpush2.bf16.msra.mxu0 0
    %845 = vmatprep.subr.bf16.mxu0 0
    %846 = vmatpush2.bf16.msra.mxu0 0
    %847 = vmatprep.subr.bf16.mxu0 0
    %848 = vmatpush2.bf16.msra.mxu0 0
    %849 = vmatprep.subr.bf16.mxu0 0
    %850 = vmatpush2.bf16.msra.mxu0 0
    %851 = vmatprep.subr.bf16.mxu0 0
    %852 = vmatpush2.bf16.msra.mxu0 0
    %853 = vmatprep.mubr.bf16.mxu0 0
    %854 = vmatmul.mubr.bf16.gmra.mxu0 %v819
    %v855 = vpop.f32.mrf.mxu0
    %v856 = vadd.f32 0.0, %v855
    %v857 = vpop.f32.mrf.mxu0
    %v858 = vpop.f32.mrf.mxu0
    %v859 = vadd.f32 0.0, %v858
    %v860 = vpop.f32.mrf.mxu0
    %861 = vdwg.mxu0
    %v862 = vadd.f32 %v856, %v859
    %v863 = vrot.slane %v862, 4
    %v864 = vadd.f32 %v862, %v863
    %v865 = vrot.slane %v864, 2
    %v866 = vadd.f32 %v864, %v865
    %v867 = vrot.slane %v866, 1
    %v868 = vadd.f32 %v866, %v867
    %v869 = vmul.f32 %v856, %v856
    %v870 = vmul.f32 %v859, %v859
    %v871 = vadd.f32 %v869, %v870
    %v872 = vrot.slane %v871, 4
    %v873 = vadd.f32 %v871, %v872
    %v874 = vrot.slane %v873, 2
    %v875 = vadd.f32 %v873, %v874
    %v876 = vrot.slane %v875, 1
    %v877 = vadd.f32 %v875, %v876
    %v878 = vsel %vm178, %v868, %v877
    %v879 = vld [vmem:[%s12] sm:$0xff]
    %v880 = vld [vmem:[%s12 + $0x8] sm:$0xff]
    %v881 = vld [vmem:[%s12 + $0x10] sm:$0xff]
    %v882 = vld [vmem:[%s12 + $0x18] sm:$0xff]
    %v883 = vld [vmem:[%s12 + $0x20] sm:$0xff]
    %v884 = vld [vmem:[%s12 + $0x28] sm:$0xff]
    %v885 = vld [vmem:[%s12 + $0x30] sm:$0xff]
    %v886 = vld [vmem:[%s12 + $0x38] sm:$0xff]
    %v887 = vld [vmem:[%s12 + $0x40] sm:$0xff]
    %v888 = vld [vmem:[%s12 + $0x48] sm:$0xff]
    %v889 = vld [vmem:[%s12 + $0x50] sm:$0xff]
    %v890 = vld [vmem:[%s12 + $0x58] sm:$0xff]
    %v891 = vld [vmem:[%s12 + $0x60] sm:$0xff]
    %v892 = vld [vmem:[%s12 + $0x68] sm:$0xff]
    %v893 = vld [vmem:[%s12 + $0x70] sm:$0xff]
    %v894 = vld [vmem:[%s12 + $0x78] sm:$0xff]
    %895 = vmatprep.subr.mxu0 0.0
    %896 = vmatpush1.msra.mxu0 %v894
    %897 = vmatprep.subr.mxu0 0.0
    %898 = vmatpush1.msra.mxu0 %v893
    %899 = vmatprep.subr.mxu0 0.0
    %900 = vmatpush1.msra.mxu0 %v892
    %901 = vmatprep.subr.mxu0 0.0
    %902 = vmatpush1.msra.mxu0 %v891
    %903 = vmatprep.subr.mxu0 0.0
    %904 = vmatpush1.msra.mxu0 %v890
    %905 = vmatprep.subr.mxu0 0.0
    %906 = vmatpush1.msra.mxu0 %v889
    %907 = vmatprep.subr.mxu0 0.0
    %908 = vmatpush1.msra.mxu0 %v888
    %909 = vmatprep.subr.mxu0 0.0
    %910 = vmatpush1.msra.mxu0 %v887
    %911 = vmatprep.subr.mxu0 0.0
    %912 = vmatpush1.msra.mxu0 %v886
    %913 = vmatprep.subr.mxu0 0.0
    %914 = vmatpush1.msra.mxu0 %v885
    %915 = vmatprep.subr.mxu0 0.0
    %916 = vmatpush1.msra.mxu0 %v884
    %917 = vmatprep.subr.mxu0 0.0
    %918 = vmatpush1.msra.mxu0 %v883
    %919 = vmatprep.subr.mxu0 0.0
    %920 = vmatpush1.msra.mxu0 %v882
    %921 = vmatprep.subr.mxu0 0.0
    %922 = vmatpush1.msra.mxu0 %v881
    %923 = vmatprep.subr.mxu0 0.0
    %924 = vmatpush1.msra.mxu0 %v880
    %925 = vmatprep.subr.mxu0 0.0
    %926 = vmatpush1.msra.mxu0 %v879
    %927 = vmatprep.subr.mxu0 0.0
    %928 = vmatpush2.msra.mxu0 0.0
    %929 = vmatprep.subr.mxu0 0.0
    %930 = vmatpush2.msra.mxu0 0.0
    %931 = vmatprep.subr.mxu0 0.0
    %932 = vmatpush2.msra.mxu0 0.0
    %933 = vmatprep.subr.mxu0 0.0
    %934 = vmatpush2.msra.mxu0 0.0
    %935 = vmatprep.subr.mxu0 0.0
    %936 = vmatpush2.msra.mxu0 0.0
    %937 = vmatprep.subr.mxu0 0.0
    %938 = vmatpush2.msra.mxu0 0.0
    %939 = vmatprep.subr.mxu0 0.0
    %940 = vmatpush2.msra.mxu0 0.0
    %941 = vmatprep.subr.mxu0 0.0
    %942 = vmatpush2.msra.mxu0 0.0
    %943 = vmatprep.subr.mxu0 0.0
    %944 = vmatpush2.msra.mxu0 0.0
    %945 = vmatprep.subr.mxu0 0.0
    %946 = vmatpush2.msra.mxu0 0.0
    %947 = vmatprep.subr.mxu0 0.0
    %948 = vmatpush2.msra.mxu0 0.0
    %949 = vmatprep.subr.mxu0 0.0
    %950 = vmatpush2.msra.mxu0 0.0
    %951 = vmatprep.subr.mxu0 0.0
    %952 = vmatpush2.msra.mxu0 0.0
    %953 = vmatprep.subr.mxu0 0.0
    %954 = vmatpush2.msra.mxu0 0.0
    %955 = vmatprep.subr.mxu0 0.0
    %956 = vmatpush2.msra.mxu0 0.0
    %957 = vmatprep.subr.mxu0 0.0
    %958 = vmatpush2.msra.mxu0 0.0
    %959 = vmatprep.mubr.f32.mxu0 0.0
    %960 = vmatmul.mubr.f32.gmra.mxu0 %v878
    %v961 = vpop.f32.mrf.mxu0
    %v962 = vadd.f32 0.0, %v961
    %v963 = vpop.f32.mrf.mxu0
    %964 = vdwg.mxu0
    %v965 = vmul.f32 %v962, 0.0078125
    %v966 = vld [vmem:[%s13] sm:$0xff]
    %v967 = vld [vmem:[%s13 + $0x8] sm:$0xff]
    %vm968 = vcmask 130048
    %v970 = vsel %vm968, %v965, 0
    %972 = vmatprep.subr.mxu0 0.0
    %973 = vmatpush1.msra.mxu0 0.0
    %974 = vmatprep.subr.mxu0 0.0
    %975 = vmatpush1.msra.mxu0 0.0
    %976 = vmatprep.subr.mxu0 0.0
    %977 = vmatpush1.msra.mxu0 0.0
    %978 = vmatprep.subr.mxu0 0.0
    %979 = vmatpush1.msra.mxu0 0.0
    %980 = vmatprep.subr.mxu0 0.0
    %981 = vmatpush1.msra.mxu0 0.0
    %982 = vmatprep.subr.mxu0 0.0
    %983 = vmatpush1.msra.mxu0 0.0
    %984 = vmatprep.subr.mxu0 0.0
    %985 = vmatpush1.msra.mxu0 0.0
    %986 = vmatprep.subr.mxu0 0.0
    %987 = vmatpush1.msra.mxu0 0.0
    %988 = vmatprep.subr.mxu0 0.0
    %989 = vmatpush1.msra.mxu0 0.0
    %990 = vmatprep.subr.mxu0 0.0
    %991 = vmatpush1.msra.mxu0 0.0
    %992 = vmatprep.subr.mxu0 0.0
    %993 = vmatpush1.msra.mxu0 0.0
    %994 = vmatprep.subr.mxu0 0.0
    %995 = vmatpush1.msra.mxu0 0.0
    %996 = vmatprep.subr.mxu0 0.0
    %997 = vmatpush1.msra.mxu0 0.0
    %998 = vmatprep.subr.mxu0 0.0
    %999 = vmatpush1.msra.mxu0 0.0
    %1000 = vmatprep.subr.mxu0 0.0
    %1001 = vmatpush1.msra.mxu0 %v967
    %1002 = vmatprep.subr.mxu0 0.0
    %1003 = vmatpush1.msra.mxu0 %v966
    %1004 = vmatprep.subr.mxu0 0.0
    %1005 = vmatpush2.msra.mxu0 0.0
    %1006 = vmatprep.subr.mxu0 0.0
    %1007 = vmatpush2.msra.mxu0 0.0
    %1008 = vmatprep.subr.mxu0 0.0
    %1009 = vmatpush2.msra.mxu0 0.0
    %1010 = vmatprep.subr.mxu0 0.0
    %1011 = vmatpush2.msra.mxu0 0.0
    %1012 = vmatprep.subr.mxu0 0.0
    %1013 = vmatpush2.msra.mxu0 0.0
    %1014 = vmatprep.subr.mxu0 0.0
    %1015 = vmatpush2.msra.mxu0 0.0
    %1016 = vmatprep.subr.mxu0 0.0
    %1017 = vmatpush2.msra.mxu0 0.0
    %1018 = vmatprep.subr.mxu0 0.0
    %1019 = vmatpush2.msra.mxu0 0.0
    %1020 = vmatprep.subr.mxu0 0.0
    %1021 = vmatpush2.msra.mxu0 0.0
    %1022 = vmatprep.subr.mxu0 0.0
    %1023 = vmatpush2.msra.mxu0 0.0
    %1024 = vmatprep.subr.mxu0 0.0
    %1025 = vmatpush2.msra.mxu0 0.0
    %1026 = vmatprep.subr.mxu0 0.0
    %1027 = vmatpush2.msra.mxu0 0.0
    %1028 = vmatprep.subr.mxu0 0.0
    %1029 = vmatpush2.msra.mxu0 0.0
    %1030 = vmatprep.subr.mxu0 0.0
    %1031 = vmatpush2.msra.mxu0 0.0
    %1032 = vmatprep.subr.mxu0 0.0
    %1033 = vmatpush2.msra.mxu0 0.0
    %1034 = vmatprep.subr.mxu0 0.0
    %1035 = vmatpush2.msra.mxu0 0.0
    %1036 = vmatprep.mubr.f32.mxu0 0.0
    %1037 = vmatmul.mubr.f32.gmra.mxu0 %v970
    %v1038 = vpop.f32.mrf.mxu0
    %v1039 = vadd.f32 0.0, %v1038
    %v1040 = vpop.f32.mrf.mxu0
    %1041 = vdwg.mxu0
    %v1042 = vmul.f32 %v1039, %v1039
    %v1044 = vrot.slane %v1042, 7
    %v1046 = vsub.f32 %v1039, %v1044
    %v1047 = vld [vmem:[%s8] sm:$0x1]
    %v1048 = vadd.f32 %v1046, 1e-05
    %v1049 = vrsqrt.pop %v1048
    %v1052 = vunpack.c.l.s4 1966171168
    %v1053 = vunpack.c.0.s8 %v1052
    %v1054 = vlaneseq
    %v1055 = vshrl.u32 %v1054, 7
    %v1056 = vsub.s32 %v1053, %v1055
    %v1057 = vrot.slane %v1049, %v1056
    %v1058 = vcombine.high %v1057, %v1057
    %v1060 = vunpack.c.l.s4 1966171168
    %v1061 = vunpack.c.0.s8 %v1060
    %v1062 = vlaneseq
    %v1063 = vshrl.u32 %v1062, 7
    %v1064 = vsub.s32 %v1061, %v1063
    %v1065 = vrot.slane %v1058, %v1064
    %v1067 = vmul.f32 %v1047, %v1065
    %v1068 = vld [vmem:[%s9] sm:$0x1]
    %v1069 = vmul.f32 %v1039, %v1067
    %v1070 = vsub.f32 %v1068, %v1069
    %v1072 = vlaneseq
    %v1073 = vshrl.u32 %v1072, 7
    %v1074 = vsub.s32 0, %v1073
    %v1075 = vrot.slane %v1067, %v1074
    %v1077 = vmul.f32 %v856, %v1075
    %v1078 = vmul.f32 %v859, %v1075
    %v1080 = vlaneseq
    %v1081 = vshrl.u32 %v1080, 7
    %v1082 = vsub.s32 0, %v1081
    %v1083 = vrot.slane %v1070, %v1082
    %v1085 = vadd.f32 %v1077, %v1083
    %v1086 = vadd.f32 %v1078, %v1083
    %v1087 = vld [vmem:[%s0] sm:$0xff]
    %v1088 = vld [vmem:[%s0 + $0x8] sm:$0xff]
    %v1089 = vadd.f32 %v1085, %v1087
    %v1090 = vadd.f32 %v1086, %v1088
    %v1091 = vmax.f32 %v1089, 0.0
    %v1092 = vmax.f32 %v1090, 0.0
    %1093 = vst [vmem:[#allocation3] sm:$0xff] %v1091
    %1094 = vst [vmem:[#allocation3 + $0x8] sm:$0xff] %v1092
    // Predicated region
    $region58: #{tpu_custom_call.1} parent=1 // pred_check
      _
    $region59: #{tpu_custom_call.1} parent=1 // pred_check_branch
      %1096 = sbr.rel (0) target = $region61
    $region60: #{tpu_custom_call.1} parent=1 // pred_region
      %s1098 = ssub.s32 256, 256
      %1099 = vsyncadd [#allocation4], %s1098
      %s1100 = sshll.u32 [#allocation3], 4
      %s1101 = int_to_ptr.vmem [resolvable:$true] %s1100
      %1106 = dma.vmem_to_hbm [thread:$0]  %s1101, 256, %s14, [#allocation4], 128, 128, 8
    $region61: #{tpu_custom_call.1} parent=1 // pred_fallthru
      _
    // Predicated region
    $region62: #{tpu_custom_call.1} parent=1 // pred_check
      _
    $region63: #{tpu_custom_call.1} parent=1 // pred_check_branch
      %1108 = sbr.rel (0) target = $region65
    $region64: #{tpu_custom_call.1} parent=1 // pred_region
      %1109 = dma.done [#allocation4], 256
    $region65: #{tpu_custom_call.1} parent=1 // pred_fallthru
      _
    %1110 = vsyncpa [#allocation4], 1

</llo_original>
